<compile_context>
chip_gen: v7x
topology: tpu7x:2x2x1
jax: 0.10.0
libtpu: 0.0.40
codegen_flags: <defaults>
</compile_context>

<pallas_src>
import functools

import jax
import jax.numpy as jnp
from jax.experimental import pallas as pl
from jax.experimental.pallas import tpu as pltpu


_LANES = 128                     # vreg lane width
_SUBLANES = 8                    # vreg sublane count (f32)
_ALIGN = _LANES * _SUBLANES      # 1024 elements: minimal tile-alignment unit


def _csa_kernel(x_ref, o_ref):
    # Upcast to f32 inside the kernel: HBM traffic stays in the input dtype,
    # while the square/cancel arithmetic keeps full precision (the VPU has
    # plenty of slack on this HBM-bound kernel).
    x = x_ref[...].astype(jnp.float32)
    zero = jnp.float32(0.0)
    r0 = jnp.maximum(x, zero)
    r1 = jnp.maximum(x - 1.0, zero)
    r2 = jnp.maximum(x - 2.0, zero)
    r3 = jnp.maximum(x - 3.0, zero)
    # Literal form of the module: relu(x)^2 - 3 relu(x-1)^2 + 3 relu(x-2)^2 - relu(x-3)^2
    res = r0 * r0 - 3.0 * (r1 * r1) + 3.0 * (r2 * r2) - r3 * r3
    o_ref[...] = res.astype(o_ref.dtype)


def _round_up(a: int, b: int) -> int:
    return ((a + b - 1) // b) * b


@functools.partial(jax.jit, static_argnames=("tile_rows",))
def compact_support_activation(x: jax.Array, *, tile_rows: int = 4096) -> jax.Array:
    """Elementwise compact-support activation. Accepts any shape; float dtypes only."""
    orig_shape = x.shape
    orig_dtype = x.dtype
    if not jnp.issubdtype(orig_dtype, jnp.floating):
        raise TypeError(
            f"compact_support_activation expects a floating dtype, got {orig_dtype}"
        )

    flat = x.reshape(-1)
    n = flat.shape[0]
    if n == 0:
        return x

    padded_n = _round_up(n, _ALIGN)
    aligned = padded_n == n
    if not aligned:
        # Zero-padding is safe because CSA(0) == 0, and the padded tail is
        # sliced off below anyway.  Only the ragged case pays this extra pass.
        flat = jnp.pad(flat, (0, padded_n - n))

    rows = padded_n // _LANES          # multiple of 8 by construction
    x2d = flat.reshape(rows, _LANES)   # lane-dense, contiguous slab

    if rows <= _SUBLANES:
        t = rows                        # single minimal block (equals full dim)
    else:
        # Ensure at least 2 grid steps (lets v7x shard across both TCs), but
        # cap block height so blocks stay ~2 MiB (f32) and VMEM use stays low
        # on every generation.
        half = _round_up(pl.cdiv(rows, 2), _SUBLANES)
        t = max(_SUBLANES, min(tile_rows, half))
    grid = (pl.cdiv(rows, t),)

    out2d = pl.pallas_call(
        _csa_kernel,
        out_shape=jax.ShapeDtypeStruct((rows, _LANES), orig_dtype),
        grid_spec=pltpu.PrefetchScalarGridSpec(
            num_scalar_prefetch=0,
            grid=grid,
            in_specs=[pl.BlockSpec((t, _LANES), lambda i: (i, 0))],
            out_specs=pl.BlockSpec((t, _LANES), lambda i: (i, 0)),
        ),
        compiler_params=pltpu.CompilerParams(
            dimension_semantics=("parallel",),
        ),
    )(x2d)

    out_flat = out2d.reshape(-1)
    if not aligned:
        out_flat = out_flat[:n]
    return out_flat.reshape(orig_shape)


def _reference(x: jax.Array) -> jax.Array:
    xf = x.astype(jnp.float32)
    r = jax.nn.relu
    res = r(xf) ** 2 - 3 * r(xf - 1) ** 2 + 3 * r(xf - 2) ** 2 - r(xf - 3) ** 2
    return res.astype(x.dtype)


if __name__ == "__main__":
    key = jax.random.PRNGKey(0)

    # Primary case: NCHW input like the PyTorch module (aligned fast path).
    x = jax.random.normal(key, (2, 4, 16, 16), dtype=jnp.float32) * 2.0 + 1.5
    out = jax.block_until_ready(compact_support_activation(x))
    ref = _reference(x)
    assert out.shape == x.shape and out.dtype == x.dtype
    # atol/rtol account for f32 cancellation of ~50-sized terms near x>=3,
    # where the exact result is 0.
    assert jnp.allclose(out, ref, atol=1e-4, rtol=1e-4), "f32 aligned mismatch"

    # Ragged case (exercises the 8*128-alignment pad path).
    k1, k2 = jax.random.split(key)
    xr = jax.random.normal(k1, (3, 5, 7), dtype=jnp.float32) * 2.0 + 1.5
    outr = jax.block_until_ready(compact_support_activation(xr))
    assert jnp.allclose(outr, _reference(xr), atol=1e-4, rtol=1e-4), "ragged mismatch"

    # bf16 case (narrow HBM traffic, f32 math inside the kernel).
    xb = (jax.random.normal(k2, (2, 4, 16, 16), dtype=jnp.float32) * 2.0 + 1.5
          ).astype(jnp.bfloat16)
    outb = jax.block_until_ready(compact_support_activation(xb))
    assert outb.dtype == jnp.bfloat16
    assert jnp.allclose(outb.astype(jnp.float32),
                        _reference(xb).astype(jnp.float32),
                        atol=5e-2, rtol=5e-2), "bf16 mismatch"

    print("KERNEL_OK")
</pallas_src>

<mosaic_0001>
module attributes {stable_mosaic.version = 11 : i64} {
  func.func @_csa_kernel(%arg0: i32, %arg1: memref<8x128xf32, #tpu.memory_space<vmem>>, %arg2: memref<8x128xf32, #tpu.memory_space<vmem>>) attributes {dimension_semantics = [#tpu.dimension_semantics<parallel>], iteration_bounds = array<i64: 2>, scalar_prefetch = 0 : i64, scratch_operands = 0 : i64, tpu.core_type = #tpu.core_type<tc>, window_params = [{transform_indices = @transform_0, window_bounds = array<i64: 8, 128>}, {transform_indices = @transform_1, window_bounds = array<i64: 8, 128>}]} {
    %c0 = arith.constant 0 : index
    %c0_0 = arith.constant 0 : index
    %0 = vector.load %arg1[%c0, %c0_0] : memref<8x128xf32, #tpu.memory_space<vmem>>, vector<8x128xf32>
    %cst = arith.constant 0.000000e+00 : f32
    %1 = vector.broadcast %cst : f32 to vector<8x128xf32>
    %2 = arith.maximumf %0, %1 : vector<8x128xf32>
    %cst_1 = arith.constant 1.000000e+00 : f32
    %3 = vector.broadcast %cst_1 : f32 to vector<8x128xf32>
    %4 = arith.subf %0, %3 : vector<8x128xf32>
    %cst_2 = arith.constant 0.000000e+00 : f32
    %5 = vector.broadcast %cst_2 : f32 to vector<8x128xf32>
    %6 = arith.maximumf %4, %5 : vector<8x128xf32>
    %cst_3 = arith.constant 2.000000e+00 : f32
    %7 = vector.broadcast %cst_3 : f32 to vector<8x128xf32>
    %8 = arith.subf %0, %7 : vector<8x128xf32>
    %cst_4 = arith.constant 0.000000e+00 : f32
    %9 = vector.broadcast %cst_4 : f32 to vector<8x128xf32>
    %10 = arith.maximumf %8, %9 : vector<8x128xf32>
    %cst_5 = arith.constant 3.000000e+00 : f32
    %11 = vector.broadcast %cst_5 : f32 to vector<8x128xf32>
    %12 = arith.subf %0, %11 : vector<8x128xf32>
    %cst_6 = arith.constant 0.000000e+00 : f32
    %13 = vector.broadcast %cst_6 : f32 to vector<8x128xf32>
    %14 = arith.maximumf %12, %13 : vector<8x128xf32>
    %15 = arith.mulf %2, %2 : vector<8x128xf32>
    %16 = arith.mulf %6, %6 : vector<8x128xf32>
    %cst_7 = arith.constant 3.000000e+00 : f32
    %17 = vector.broadcast %cst_7 : f32 to vector<8x128xf32>
    %18 = arith.mulf %17, %16 : vector<8x128xf32>
    %19 = arith.subf %15, %18 : vector<8x128xf32>
    %20 = arith.mulf %10, %10 : vector<8x128xf32>
    %cst_8 = arith.constant 3.000000e+00 : f32
    %21 = vector.broadcast %cst_8 : f32 to vector<8x128xf32>
    %22 = arith.mulf %21, %20 : vector<8x128xf32>
    %23 = arith.addf %19, %22 : vector<8x128xf32>
    %24 = arith.mulf %14, %14 : vector<8x128xf32>
    %25 = arith.subf %23, %24 : vector<8x128xf32>
    %c0_9 = arith.constant 0 : index
    %c0_10 = arith.constant 0 : index
    %26 = vector.load %arg2[%c0_9, %c0_10] : memref<8x128xf32, #tpu.memory_space<vmem>>, vector<8x128xf32>
    tpu.vector_store %arg2[%c0_9, %c0_10], %25 {strides = array<i32>} : memref<8x128xf32, #tpu.memory_space<vmem>>, vector<8x128xf32>,
    return
  }
  func.func @transform_0(%arg0: i32) -> (i32, i32) {
    %c0_i32 = arith.constant 0 : i32
    %c0_i32_0 = arith.constant 0 : i32
    return %arg0, %c0_i32 : i32, i32
  }
  func.func @transform_1(%arg0: i32) -> (i32, i32) {
    %c0_i32 = arith.constant 0 : i32
    %c0_i32_0 = arith.constant 0 : i32
    return %arg0, %c0_i32 : i32, i32
  }
}

</mosaic_0001>

<llo_original>
// kernel: compact_support_activation.1
$region0: #{compact_support_activation.1}
  #allocation0 [shape = 'u32[]', space=smem, size = 0x4, offset = 0x4, fixed_abs, tag = 'smem constant byte address 0x4 - core index']
  #allocation1 [shape = 'u32[144,128]{1,0:T(1,128)}', space=vmem, size = 0x12000, scoped, tag = 'internal scratch']
  %s0 = inlined_call_operand.vmem [shape: f32[16,128], index: 0, kind: input, shape index: {}]
  %s1 = inlined_call_operand.vmem [shape: f32[16,128], index: 1, kind: output, shape index: {}]
  %s2 = sld [smem:[#allocation0]]
  $region37: #{compact_support_activation.1} parent=0
    _
  %s4 = ssub.s32 1, %s2
  %s5 = scalar_select 0, %s4, %s2
  loop: start=0, step=1, limit=4
  $region2: #{compact_support_activation.1} parent=0 // loop_pre_header
    _
  $region3: #{compact_support_activation.1} parent=0 // loop_header
    %s7 = sphi 0, %s11
    %p8 = scmp.ge.s32.totalorder %s7, 4
    %s17 = sphi 0, %s19
    %s20 = sphi 0, %s17
    %s21 = sphi 0, %s20
    %s37 = sphi 0, %s21
    %s43 = sphi 0, %s45
    %s46 = sphi 0, %s43
    %s47 = sphi 0, %s46
    %s63 = sphi 0, %s47
  $region4: #{compact_support_activation.1} parent=0 // loop_header_branch
    %10 = sbr.rel (%p8) target = $region8
  $region5: #{compact_support_activation.1} parent=0 // loop_body
    %s12 = ssub.s32 %s7, 1
    %s13 = ssub.s32 %s7, 2
    %s14 = sadd.s32 %s7, 1
    %s15 = ssub.s32 %s7, %s14
    %p16 = scmp.eq.s32.totalorder %s15, 0
    %s18 = sadd.s32 %s17, 1
    %s19 = scalar_select %p16, %s17, %s18
    %p22 = pneg %p16
    %p23 = scmp.eq.s32.totalorder %s7, 1
    %p24 = por %p22, %p23
    %p25 = scmp.ne.s32.totalorder %s17, %s20
    %p26 = scmp.eq.s32.totalorder %s7, 0
    %p27 = por %p25, %p26
    %p28 = scmp.ne.s32.totalorder %s17, %s20
    %p29 = scmp.eq.s32.totalorder %s12, 1
    %p30 = por %p28, %p29
    %p31 = scmp.ne.s32.totalorder %s20, %s21
    %p32 = scmp.eq.s32.totalorder %s12, 0
    %p33 = por %p31, %p32
    %p34 = scmp.ne.s32.totalorder %s20, %s21
    %p35 = scmp.eq.s32.totalorder %s13, 1
    %p36 = por %p34, %p35
    %p38 = scmp.ne.s32.totalorder %s21, %s37
    %p39 = scmp.eq.s32.totalorder %s13, 0
    %p40 = por %p38, %p39
    %s41 = ssub.s32 %s7, %s14
    %p42 = scmp.eq.s32.totalorder %s41, 0
    %s44 = sadd.s32 %s43, 1
    %s45 = scalar_select %p42, %s43, %s44
    %p48 = pneg %p42
    %p49 = scmp.eq.s32.totalorder %s7, 1
    %p50 = por %p48, %p49
    %p51 = scmp.ne.s32.totalorder %s43, %s46
    %p52 = scmp.eq.s32.totalorder %s7, 0
    %p53 = por %p51, %p52
    %p54 = scmp.ne.s32.totalorder %s43, %s46
    %p55 = scmp.eq.s32.totalorder %s12, 1
    %p56 = por %p54, %p55
    %p57 = scmp.ne.s32.totalorder %s46, %s47
    %p58 = scmp.eq.s32.totalorder %s12, 0
    %p59 = por %p57, %p58
    %p60 = scmp.ne.s32.totalorder %s46, %s47
    %p61 = scmp.eq.s32.totalorder %s13, 1
    %p62 = por %p60, %p61
    %p64 = scmp.ne.s32.totalorder %s47, %s63
    %p65 = scmp.eq.s32.totalorder %s13, 0
    %p66 = por %p64, %p65
    %p67 = scmp.le.s32.totalorder 1, %s7
    %p68 = scmp.lt.s32.totalorder %s7, 3
    %p69 = pnand %p67, %p68
    %p70 = pneg %p69
    // Predicated region
    $region9: #{compact_support_activation.1} parent=5 // pred_check
      _
    $region10: #{compact_support_activation.1} parent=5 // pred_check_branch
      %72 = sbr.rel (%p69) target = $region12
    $region11: #{compact_support_activation.1} parent=5 // pred_region
      %s73 = ssub.s32 %s7, 1
    $region12: #{compact_support_activation.1} parent=5 // pred_fallthru
      _
    %p74 = scmp.lt.s32.totalorder %s7, 2
    // Predicated region
    $region13: #{compact_support_activation.1} parent=5 // pred_check
      %p75 = pneg %p74
    $region14: #{compact_support_activation.1} parent=5 // pred_check_branch
      %77 = sbr.rel (%p75) target = $region16
    $region15: #{compact_support_activation.1} parent=5 // pred_region
      // Predicated region
      $region17: #{compact_support_activation.1} parent=15 // pred_check
        %p78 = pneg %p27
      $region18: #{compact_support_activation.1} parent=15 // pred_check_branch
        %80 = sbr.rel (%p78) target = $region20
      $region19: #{compact_support_activation.1} parent=15 // pred_region
        %p81 = scmp.lt.s32.totalorder %s7, 1
        %s82 = scalar_select %p81, %s7, 1
        %s83 = smul.addr %s82, 8
        %s84 = scalar_lea.vmem %s0, %s83
      $region20: #{compact_support_activation.1} parent=15 // pred_fallthru
        _
    $region16: #{compact_support_activation.1} parent=5 // pred_fallthru
      _
    %p85 = scmp.le.s32.totalorder 1, %s7
    %p86 = scmp.lt.s32.totalorder %s7, 3
    %p87 = pnand %p85, %p86
    %p88 = pneg %p87
    // Predicated region
    $region21: #{compact_support_activation.1} parent=5 // pred_check
      _
    $region22: #{compact_support_activation.1} parent=5 // pred_check_branch
      %90 = sbr.rel (%p87) target = $region24
    $region23: #{compact_support_activation.1} parent=5 // pred_region
      %s91 = ssub.s32 %s7, 1
      %p92 = scmp.lt.s32.totalorder %s12, 1
      %s93 = scalar_select %p92, %s12, 1
      %s94 = smul.addr %s93, 8
      %s95 = scalar_lea.vmem %s0, %s94
      %p96 = pneg %p33
      %p97 = pneg %p30
      %p98 = pneg %p59
      %p99 = pneg %p56
      %p100 = scmp.lt.s32.totalorder %s12, 1
      %s101 = scalar_select %p100, %s12, 1
      %s102 = smul.addr %s101, 8
      %s103 = scalar_lea.vmem %s1, %s102
      %p104 = scmp.lt.s32.totalorder %s12, 1
      %s105 = scalar_select %p104, %s12, 1
      %s106 = smul.addr %s105, 8
      %s107 = scalar_lea.vmem %s0, %s106
      %p108 = scmp.lt.s32.totalorder %s12, 1
      %s109 = scalar_select %p108, %s12, 1
      %s110 = smul.addr %s109, 8
      %s111 = scalar_lea.vmem %s1, %s110
      %v112 = vld [vmem:[%s107] sm:$0xff]
      %v113 = vmax.f32 %v112, 0.0
      %v114 = vsub.f32 %v112, 1.0
      %v115 = vmax.f32 %v114, 0.0
      %v116 = vsub.f32 %v112, 2.0
      %v117 = vmax.f32 %v116, 0.0
      %v118 = vsub.f32 %v112, 3.0
      %v119 = vmax.f32 %v118, 0.0
      %v120 = vmul.f32 %v113, %v113
      %v121 = vmul.f32 %v115, %v115
      %v122 = vmul.f32 %v121, 3.0
      %v123 = vsub.f32 %v120, %v122
      %v124 = vmul.f32 %v117, %v117
      %v125 = vmul.f32 %v124, 3.0
      %v126 = vadd.f32 %v123, %v125
      %v127 = vmul.f32 %v119, %v119
      %v128 = vsub.f32 %v126, %v127
      %129 = vst [vmem:[%s111] sm:$0xff] %v128
      %p130 = scmp.lt.s32.totalorder %s12, 1
      %s131 = scalar_select %p130, %s12, 1
      %s132 = smul.addr %s131, 8
      %s133 = scalar_lea.vmem %s1, %s132
      // Predicated region
      $region25: #{compact_support_activation.1} parent=23 // pred_check
        %p134 = pneg %p56
      $region26: #{compact_support_activation.1} parent=23 // pred_check_branch
        %136 = sbr.rel (%p134) target = $region28
      $region27: #{compact_support_activation.1} parent=23 // pred_region
        _
      $region28: #{compact_support_activation.1} parent=23 // pred_fallthru
        _
    $region24: #{compact_support_activation.1} parent=5 // pred_fallthru
      _
    %p137 = scmp.le.s32.totalorder 2, %s7
    // Predicated region
    $region29: #{compact_support_activation.1} parent=5 // pred_check
      %p138 = pneg %p137
    $region30: #{compact_support_activation.1} parent=5 // pred_check_branch
      %140 = sbr.rel (%p138) target = $region32
    $region31: #{compact_support_activation.1} parent=5 // pred_region
      %s141 = ssub.s32 %s7, 2
      // Predicated region
      $region33: #{compact_support_activation.1} parent=31 // pred_check
        %p142 = pneg %p62
      $region34: #{compact_support_activation.1} parent=31 // pred_check_branch
        %144 = sbr.rel (%p142) target = $region36
      $region35: #{compact_support_activation.1} parent=31 // pred_region
        %p145 = scmp.lt.s32.totalorder %s13, 1
        %s146 = scalar_select %p145, %s13, 1
        %s147 = smul.addr %s146, 8
        %s148 = scalar_lea.vmem %s1, %s147
      $region36: #{compact_support_activation.1} parent=31 // pred_fallthru
        _
    $region32: #{compact_support_activation.1} parent=5 // pred_fallthru
      _
  $region6: #{compact_support_activation.1} parent=0 // loop_footer
    %s11 = sadd.s32 1, %s7
  $region7: #{compact_support_activation.1} parent=0 // loop_footer_branch
    %6 = sbr.rel target = $region3
  $region8: #{compact_support_activation.1} parent=0 // loop_exit
    _

</llo_original>
